<compile_context>
chip_gen: v7x
topology: tpu7x:2x2x1
jax: 0.10.0
libtpu: 0.0.40
codegen_flags: <defaults>
</compile_context>

<pallas_src>
import functools

import jax
import jax.numpy as jnp
from jax.experimental import pallas as pl
from jax.experimental.pallas import tpu as pltpu

BN_EPS = 1e-5
LANE = 128


def _round_up(x, m):
    return (x + m - 1) // m * m


# -----------------------------------------------------------------------------
# Kernel: 3 MXU matmuls + f32 bias/ReLU epilogues. Weights arrive BN-folded,
# lane-padded (hidden dims) and bf16-cast by prepare_params(); x arrives raw f32.
# -----------------------------------------------------------------------------
def _similarity_kernel(x_ref, w1_ref, b1_ref, w2_ref, b2_ref, w3_ref, b3_ref,
                       o_ref, *, out_dim):
    # Layer 1: (folded BN1 +) Linear1 + ReLU   (Dropout = identity in eval mode)
    x = x_ref[...].astype(jnp.bfloat16)          # in-kernel cast, hidden under DMA
    h = jnp.dot(x, w1_ref[...], preferred_element_type=jnp.float32)
    h = jnp.maximum(h + b1_ref[...], 0.0)

    # Layer 2: (folded BN2 +) Linear2 + ReLU
    h = jnp.dot(h.astype(jnp.bfloat16), w2_ref[...],
                preferred_element_type=jnp.float32)
    h = jnp.maximum(h + b2_ref[...], 0.0)

    # Layer 3: lane-padded matmul, then a narrow (masked) store of the 2 real logits.
    o = jnp.dot(h.astype(jnp.bfloat16), w3_ref[...],
                preferred_element_type=jnp.float32)
    o = o + b3_ref[...]
    o_ref[...] = o[:, :out_dim]


# -----------------------------------------------------------------------------
# One-time parameter preparation: BN folding (f32) + lane padding + bf16 cast.
# -----------------------------------------------------------------------------
def _fold_bn_into_linear(gamma, beta, mean, var, w, b):
    """Eval-mode BN followed by Linear(W:(in,out), b:(1,out)) -> single affine."""
    s = gamma * jax.lax.rsqrt(var + BN_EPS)      # (1, in)
    t = beta - mean * s                          # (1, in)
    w_f = s.reshape(-1, 1) * w                   # (in, out)
    b_f = b + t @ w                              # (1, out)
    return w_f, b_f


def _pad2(a, rows, cols):
    r, c = a.shape
    return jnp.pad(a, ((0, rows - r), (0, cols - c)))


def prepare_params(params):
    """Fold eval-mode BNs, pad hidden/output lanes, cast matmul operands to bf16.

    Call once; the result is reused by every similarity_net_forward call, so the
    per-forward path never re-touches the weights.
    """
    F, H = params["w1"].shape
    OUT = params["w3"].shape[1]
    Hp = _round_up(max(H, LANE), LANE)
    OUTp = _round_up(max(OUT, LANE), LANE)

    w1f, b1f = _fold_bn_into_linear(params["g1"], params["bt1"], params["m1"],
                                    params["v1"], params["w1"], params["b1"])
    w2f, b2f = _fold_bn_into_linear(params["g2"], params["bt2"], params["m2"],
                                    params["v2"], params["w2"], params["b2"])

    return {
        "w1": _pad2(w1f, F, Hp).astype(jnp.bfloat16),        # (F, Hp)  — K kept unpadded
        "b1": _pad2(b1f, 1, Hp).astype(jnp.float32),
        "w2": _pad2(w2f, Hp, Hp).astype(jnp.bfloat16),
        "b2": _pad2(b2f, 1, Hp).astype(jnp.float32),
        "w3": _pad2(params["w3"], Hp, OUTp).astype(jnp.bfloat16),
        "b3": _pad2(params["b3"], 1, OUTp).astype(jnp.float32),
        "in_dim": F,
        "hidden_dim": H,
        "out_dim": OUT,
    }


# -----------------------------------------------------------------------------
# Forward wrapper
# -----------------------------------------------------------------------------
def similarity_net_forward(x, prepared, *, tile_n=None):
    """x: (N, in_features) float32. Returns (N, 2) float32."""
    N, F = x.shape
    assert prepared["in_dim"] == F, "feature-dim mismatch with prepared params"
    Hp = prepared["w1"].shape[1]
    OUTp = prepared["w3"].shape[1]
    H = prepared["hidden_dim"]
    OUT = prepared["out_dim"]

    # ---- batch tiling ---------------------------------------------------------
    if tile_n is None:
        tile_n = 1024                                   # amortizes ~0.35 us/step overhead
    TN = _round_up(min(tile_n, max(N, 1)), 16)          # bf16 sublane packing
    # v7x has 2 TensorCores: keep >=2 "parallel" grid steps whenever the batch allows.
    if N > 16 and pl.cdiv(N, TN) < 2:
        TN = _round_up(pl.cdiv(N, 2), 16)
    grid = (pl.cdiv(N, TN),)

    # ---- VMEM budget: double-buffered x/out tiles, 2x resident weights ---------
    vmem_bytes = int(
        2 * TN * F * 4                                  # pipelined x tiles (f32)
        + 2 * TN * OUT * 4                              # pipelined narrow out tiles
        + 2 * ((F * Hp + Hp * Hp + Hp * OUTp) * 2       # weights (Pallas double-buffers)
               + (2 * Hp + OUTp) * 4)                   # biases
        + 4 * TN * Hp * 4                               # live f32/bf16 intermediates
        + (2 << 20)                                     # headroom
    )
    vmem_bytes = int(min(max(vmem_bytes, 4 << 20), 48 << 20))   # v7x: 64 MiB physical

    # CostEstimate on real (unpadded) work, not padded shapes.
    cost = pl.CostEstimate(
        flops=2 * N * (F * H + H * H + H * OUT),
        transcendentals=0,
        bytes_accessed=int(
            N * F * 4
            + prepared["w1"].size * 2 + prepared["w2"].size * 2 + prepared["w3"].size * 2
            + (prepared["b1"].size + prepared["b2"].size + prepared["b3"].size) * 4
            + N * OUT * 4
        ),
    )

    return pl.pallas_call(
        functools.partial(_similarity_kernel, out_dim=OUT),
        out_shape=jax.ShapeDtypeStruct((N, OUT), jnp.float32),
        grid=grid,
        in_specs=[
            pl.BlockSpec((TN, F), lambda i: (i, 0)),      # x tile (unpadded, batch-tiled)
            pl.BlockSpec((F, Hp), lambda i: (0, 0)),      # W1' (BN1-folded, resident)
            pl.BlockSpec((1, Hp), lambda i: (0, 0)),      # b1'
            pl.BlockSpec((Hp, Hp), lambda i: (0, 0)),     # W2' (BN2-folded, resident)
            pl.BlockSpec((1, Hp), lambda i: (0, 0)),      # b2'
            pl.BlockSpec((Hp, OUTp), lambda i: (0, 0)),   # W3 (lane-padded, resident)
            pl.BlockSpec((1, OUTp), lambda i: (0, 0)),    # b3 (lane-padded)
        ],
        out_specs=pl.BlockSpec((TN, OUT), lambda i: (i, 0)),   # narrow masked store
        compiler_params=pltpu.CompilerParams(
            dimension_semantics=("parallel",),
            vmem_limit_bytes=vmem_bytes,
        ),
        cost_estimate=cost,
    )(x, prepared["w1"], prepared["b1"], prepared["w2"], prepared["b2"],
      prepared["w3"], prepared["b3"])


# -----------------------------------------------------------------------------
# Parameters & references
# -----------------------------------------------------------------------------
def init_params(key, in_features, hidden_units):
    """Deterministic synthetic parameters matching SimilarityNet.__init__ shapes.
    PyTorch Linear weight (out, in) is stored here pre-transposed as (in, out)."""
    ks = jax.random.split(key, 8)
    f32 = jnp.float32
    params = {
        # BatchNorm1d(in_features): gamma, beta, running_mean, running_var
        "g1":  (1.0 + 0.05 * jax.random.normal(ks[0], (1, in_features))).astype(f32),
        "bt1": (0.05 * jax.random.normal(ks[1], (1, in_features))).astype(f32),
        "m1":  (0.1 * jax.random.normal(ks[2], (1, in_features))).astype(f32),
        "v1":  (1.0 + 0.1 * jax.random.uniform(ks[3], (1, in_features))).astype(f32),
        # Linear(in_features -> hidden)
        "w1": (jax.random.normal(ks[4], (in_features, hidden_units)) /
               jnp.sqrt(in_features)).astype(f32),
        "b1": (0.01 * jnp.arange(hidden_units, dtype=f32)).reshape(1, hidden_units),
        # BatchNorm1d(hidden)
        "g2":  (1.0 + 0.05 * jax.random.normal(ks[5], (1, hidden_units))).astype(f32),
        "bt2": jnp.zeros((1, hidden_units), f32),
        "m2":  jnp.full((1, hidden_units), 0.05, f32),
        "v2":  jnp.ones((1, hidden_units), f32),
        # Linear(hidden -> hidden)
        "w2": (jax.random.normal(ks[6], (hidden_units, hidden_units)) /
               jnp.sqrt(hidden_units)).astype(f32),
        "b2": jnp.full((1, hidden_units), 0.02, f32),
        # Linear(hidden -> 2)
        "w3": (jax.random.normal(ks[7], (hidden_units, 2)) /
               jnp.sqrt(hidden_units)).astype(f32),
        "b3": jnp.array([[0.1, -0.1]], f32),
    }
    return params


def reference_forward(x, p):
    """Pure-JAX f32 reference of the original eval-mode module (no folding/bf16)."""
    h = (x - p["m1"]) * jax.lax.rsqrt(p["v1"] + BN_EPS) * p["g1"] + p["bt1"]
    h = jnp.maximum(h @ p["w1"] + p["b1"], 0.0)
    h = (h - p["m2"]) * jax.lax.rsqrt(p["v2"] + BN_EPS) * p["g2"] + p["bt2"]
    h = jnp.maximum(h @ p["w2"] + p["b2"], 0.0)
    return h @ p["w3"] + p["b3"]


def reference_forward_bf16(x, p):
    """Pure-JAX reference following the same folded-BN / bf16-operand path."""
    w1f, b1f = _fold_bn_into_linear(p["g1"], p["bt1"], p["m1"], p["v1"], p["w1"], p["b1"])
    w2f, b2f = _fold_bn_into_linear(p["g2"], p["bt2"], p["m2"], p["v2"], p["w2"], p["b2"])
    bf16 = jnp.bfloat16
    h = jnp.dot(x.astype(bf16), w1f.astype(bf16), preferred_element_type=jnp.float32) + b1f
    h = jnp.maximum(h, 0.0)
    h = jnp.dot(h.astype(bf16), w2f.astype(bf16), preferred_element_type=jnp.float32) + b2f
    h = jnp.maximum(h, 0.0)
    return jnp.dot(h.astype(bf16), p["w3"].astype(bf16),
                   preferred_element_type=jnp.float32) + p["b3"]


if __name__ == "__main__":
    key = jax.random.PRNGKey(0)
    k_x, k_p = jax.random.split(key)

    N, IN_FEATURES, HIDDEN = 24, 16, 32
    x = jax.random.normal(k_x, (N, IN_FEATURES), dtype=jnp.float32)
    params = init_params(k_p, IN_FEATURES, HIDDEN)

    # One-time prep (BN folding + padding + bf16 cast) — hoisted out of the forward path.
    prepared = prepare_params(params)

    # tile_n=16 -> grid=(2,) to exercise the batch-tiled, parallel-axis pipeline
    # (including a partial boundary block, since 24 is not a multiple of 16).
    out = similarity_net_forward(x, prepared, tile_n=16)
    out = jax.block_until_ready(out)
    assert out.shape == (N, 2)

    # Same-path (folded + bf16 operands) reference: should match very closely.
    ref_bf16 = reference_forward_bf16(x, params)
    assert jnp.allclose(out, ref_bf16, atol=5e-3, rtol=5e-3), \
        "mismatch vs folded/bf16 reference"

    # Original module semantics in f32: bf16 operand rounding only.
    ref_f32 = reference_forward(x, params)
    assert jnp.allclose(out, ref_f32, atol=7e-2, rtol=5e-2), \
        "mismatch vs f32 module reference"

    print("KERNEL_OK")
</pallas_src>

<mosaic_0001>
module attributes {stable_mosaic.version = 11 : i64} {
  func.func @_similarity_kernel(%arg0: i32, %arg1: memref<16x16xf32, #tpu.memory_space<vmem>>, %arg2: memref<16x128xbf16, #tpu.memory_space<vmem>>, %arg3: memref<1x128xf32, #tpu.memory_space<vmem>>, %arg4: memref<128x128xbf16, #tpu.memory_space<vmem>>, %arg5: memref<1x128xf32, #tpu.memory_space<vmem>>, %arg6: memref<128x128xbf16, #tpu.memory_space<vmem>>, %arg7: memref<1x128xf32, #tpu.memory_space<vmem>>, %arg8: memref<16x2xf32, #tpu.memory_space<vmem>>) attributes {dimension_semantics = [#tpu.dimension_semantics<parallel>], iteration_bounds = array<i64: 2>, scalar_prefetch = 0 : i64, scratch_operands = 0 : i64, tpu.core_type = #tpu.core_type<tc>, window_params = [{transform_indices = @transform_0, window_bounds = array<i64: 16, 16>}, {pipeline_mode = #tpu.pipeline_mode<synchronous>, transform_indices = @transform_1, window_bounds = array<i64: 16, 128>}, {pipeline_mode = #tpu.pipeline_mode<synchronous>, transform_indices = @transform_2, window_bounds = array<i64: 1, 128>}, {pipeline_mode = #tpu.pipeline_mode<synchronous>, transform_indices = @transform_3, window_bounds = array<i64: 128, 128>}, {pipeline_mode = #tpu.pipeline_mode<synchronous>, transform_indices = @transform_4, window_bounds = array<i64: 1, 128>}, {pipeline_mode = #tpu.pipeline_mode<synchronous>, transform_indices = @transform_5, window_bounds = array<i64: 128, 128>}, {pipeline_mode = #tpu.pipeline_mode<synchronous>, transform_indices = @transform_6, window_bounds = array<i64: 1, 128>}, {transform_indices = @transform_7, window_bounds = array<i64: 16, 2>}]} {
    %c0 = arith.constant 0 : index
    %c0_0 = arith.constant 0 : index
    %0 = vector.load %arg1[%c0, %c0_0] : memref<16x16xf32, #tpu.memory_space<vmem>>, vector<16x16xf32>
    %1 = arith.truncf %0 : vector<16x16xf32> to vector<16x16xbf16>
    %c0_1 = arith.constant 0 : index
    %c0_2 = arith.constant 0 : index
    %2 = vector.load %arg2[%c0_1, %c0_2] : memref<16x128xbf16, #tpu.memory_space<vmem>>, vector<16x128xbf16>
    %cst = arith.constant dense<0.000000e+00> : vector<16x128xf32>
    %3 = tpu.matmul %1, %2, %cst {dimension_numbers = #tpu.dot_dimension_numbers<[1], [0], [0], [1], [0, 0, 1, 1], [], []>} : vector<16x16xbf16>, vector<16x128xbf16>, vector<16x128xf32> -> vector<16x128xf32>
    %c0_3 = arith.constant 0 : index
    %c0_4 = arith.constant 0 : index
    %4 = vector.load %arg3[%c0_3, %c0_4] : memref<1x128xf32, #tpu.memory_space<vmem>>, vector<1x128xf32>
    %5 = vector.broadcast %4 : vector<1x128xf32> to vector<16x128xf32>
    %6 = arith.addf %3, %5 : vector<16x128xf32>
    %cst_5 = arith.constant 0.000000e+00 : f32
    %7 = vector.broadcast %cst_5 : f32 to vector<16x128xf32>
    %8 = arith.maximumf %6, %7 : vector<16x128xf32>
    %9 = arith.truncf %8 : vector<16x128xf32> to vector<16x128xbf16>
    %c0_6 = arith.constant 0 : index
    %c0_7 = arith.constant 0 : index
    %10 = vector.load %arg4[%c0_6, %c0_7] : memref<128x128xbf16, #tpu.memory_space<vmem>>, vector<128x128xbf16>
    %cst_8 = arith.constant dense<0.000000e+00> : vector<16x128xf32>
    %11 = tpu.matmul %9, %10, %cst_8 {dimension_numbers = #tpu.dot_dimension_numbers<[1], [0], [0], [1], [0, 0, 1, 1], [], []>} : vector<16x128xbf16>, vector<128x128xbf16>, vector<16x128xf32> -> vector<16x128xf32>
    %c0_9 = arith.constant 0 : index
    %c0_10 = arith.constant 0 : index
    %12 = vector.load %arg5[%c0_9, %c0_10] : memref<1x128xf32, #tpu.memory_space<vmem>>, vector<1x128xf32>
    %13 = vector.broadcast %12 : vector<1x128xf32> to vector<16x128xf32>
    %14 = arith.addf %11, %13 : vector<16x128xf32>
    %cst_11 = arith.constant 0.000000e+00 : f32
    %15 = vector.broadcast %cst_11 : f32 to vector<16x128xf32>
    %16 = arith.maximumf %14, %15 : vector<16x128xf32>
    %17 = arith.truncf %16 : vector<16x128xf32> to vector<16x128xbf16>
    %c0_12 = arith.constant 0 : index
    %c0_13 = arith.constant 0 : index
    %18 = vector.load %arg6[%c0_12, %c0_13] : memref<128x128xbf16, #tpu.memory_space<vmem>>, vector<128x128xbf16>
    %cst_14 = arith.constant dense<0.000000e+00> : vector<16x128xf32>
    %19 = tpu.matmul %17, %18, %cst_14 {dimension_numbers = #tpu.dot_dimension_numbers<[1], [0], [0], [1], [0, 0, 1, 1], [], []>} : vector<16x128xbf16>, vector<128x128xbf16>, vector<16x128xf32> -> vector<16x128xf32>
    %c0_15 = arith.constant 0 : index
    %c0_16 = arith.constant 0 : index
    %20 = vector.load %arg7[%c0_15, %c0_16] : memref<1x128xf32, #tpu.memory_space<vmem>>, vector<1x128xf32>
    %21 = vector.broadcast %20 : vector<1x128xf32> to vector<16x128xf32>
    %22 = arith.addf %19, %21 : vector<16x128xf32>
    %23 = vector.extract_strided_slice %22 {offsets = [0, 0], sizes = [16, 2], strides = [1, 1]} : vector<16x128xf32> to vector<16x2xf32>
    %c0_17 = arith.constant 0 : index
    %c0_18 = arith.constant 0 : index
    %24 = vector.load %arg8[%c0_17, %c0_18] : memref<16x2xf32, #tpu.memory_space<vmem>>, vector<16x2xf32>
    tpu.vector_store %arg8[%c0_17, %c0_18], %23 {strides = array<i32>} : memref<16x2xf32, #tpu.memory_space<vmem>>, vector<16x2xf32>,
    return
  }
  func.func @transform_0(%arg0: i32) -> (i32, i32) {
    %c0_i32 = arith.constant 0 : i32
    %c0_i32_0 = arith.constant 0 : i32
    return %arg0, %c0_i32 : i32, i32
  }
  func.func @transform_1(%arg0: i32) -> (i32, i32) {
    %c0_i32 = arith.constant 0 : i32
    %c0_i32_0 = arith.constant 0 : i32
    %c0_i32_1 = arith.constant 0 : i32
    return %c0_i32, %c0_i32_0 : i32, i32
  }
  func.func @transform_2(%arg0: i32) -> (i32, i32) {
    %c0_i32 = arith.constant 0 : i32
    %c0_i32_0 = arith.constant 0 : i32
    %c0_i32_1 = arith.constant 0 : i32
    return %c0_i32, %c0_i32_0 : i32, i32
  }
  func.func @transform_3(%arg0: i32) -> (i32, i32) {
    %c0_i32 = arith.constant 0 : i32
    %c0_i32_0 = arith.constant 0 : i32
    %c0_i32_1 = arith.constant 0 : i32
    return %c0_i32, %c0_i32_0 : i32, i32
  }
  func.func @transform_4(%arg0: i32) -> (i32, i32) {
    %c0_i32 = arith.constant 0 : i32
    %c0_i32_0 = arith.constant 0 : i32
    %c0_i32_1 = arith.constant 0 : i32
    return %c0_i32, %c0_i32_0 : i32, i32
  }
  func.func @transform_5(%arg0: i32) -> (i32, i32) {
    %c0_i32 = arith.constant 0 : i32
    %c0_i32_0 = arith.constant 0 : i32
    %c0_i32_1 = arith.constant 0 : i32
    return %c0_i32, %c0_i32_0 : i32, i32
  }
  func.func @transform_6(%arg0: i32) -> (i32, i32) {
    %c0_i32 = arith.constant 0 : i32
    %c0_i32_0 = arith.constant 0 : i32
    %c0_i32_1 = arith.constant 0 : i32
    return %c0_i32, %c0_i32_0 : i32, i32
  }
  func.func @transform_7(%arg0: i32) -> (i32, i32) {
    %c0_i32 = arith.constant 0 : i32
    %c0_i32_0 = arith.constant 0 : i32
    return %arg0, %c0_i32 : i32, i32
  }
}

</mosaic_0001>

<llo_original>
// kernel: tpu_custom_call.1
$region0: #{tpu_custom_call.1}
  #allocation0 [shape = 'u32[]', space=smem, size = 0x4, offset = 0x4, fixed_abs, tag = 'smem constant byte address 0x4 - core index']
  #allocation1 [shape = 'u32[144,128]{1,0:T(1,128)}', space=vmem, size = 0x12000, scoped, tag = 'internal scratch']
  %s0 = inlined_call_operand.vmem [shape: f32[24,16], index: 0, kind: input, shape index: {}]
  %s1 = inlined_call_operand.vmem [shape: bf16[16,128], index: 1, kind: input, shape index: {}]
  %s2 = inlined_call_operand.vmem [shape: f32[1,128], index: 2, kind: input, shape index: {}]
  %s3 = inlined_call_operand.hbm [shape: bf16[128,128], index: 3, kind: input, shape index: {}]
  %s4 = inlined_call_operand.vmem [shape: f32[1,128], index: 4, kind: input, shape index: {}]
  %s5 = inlined_call_operand.hbm [shape: bf16[128,128], index: 5, kind: input, shape index: {}]
  %s6 = inlined_call_operand.vmem [shape: f32[1,128], index: 6, kind: input, shape index: {}]
  %s7 = inlined_call_operand.vmem [shape: f32[24,2], index: 7, kind: output, shape index: {}]
  %s8 = sld [smem:[#allocation0]]
  $region117: #{tpu_custom_call.1} parent=0
    _
  %s10 = ssub.s32 1, %s8
  %s11 = scalar_select 0, %s10, %s8
  $region1: #{tpu_custom_call.1} parent=0
    #allocation2 [shape = 'u8[32768]{0}', space=vmem, size = 0x8000, scoped, tag = 'input window, operand 3, single buffered']
    #allocation3 [shape = 's32[2]{0}', space=sflag, size = 0x8, scoped, tag = 'scoped memory for tpu_custom_call.1']
    #allocation4 [shape = 'u8[32768]{0}', space=vmem, size = 0x8000, scoped, tag = 'input window, operand 5, single buffered']
    #allocation5 [shape = 's32[1]{0}', space=sflag, size = 0x4, scoped, tag = 'scoped memory for tpu_custom_call.1']
    #allocation6 [shape = 'u8[16384]{0}', space=vmem, size = 0x4000, scoped, tag = 'output window, operand 0']
    %12 = vsyncpa [#allocation3], 0
    %13 = vsyncpa [#allocation5], 0
    loop: start=0, step=1, limit=4
    $region2: #{tpu_custom_call.1} parent=1 // loop_pre_header
      _
    $region3: #{tpu_custom_call.1} parent=1 // loop_header
      %s15 = sphi 0, %s19
      %p16 = scmp.ge.s32.totalorder %s15, 4
      %s25 = sphi 0, %s27
      %s28 = sphi 0, %s25
      %s29 = sphi 0, %s28
      %s45 = sphi 0, %s29
      %s49 = sphi 0, %s49
      %s51 = sphi 0, %s49
      %s52 = sphi 0, %s51
      %s66 = sphi 0, %s52
      %s70 = sphi 0, %s70
      %s72 = sphi 0, %s70
      %s73 = sphi 0, %s72
      %s87 = sphi 0, %s73
      %s91 = sphi 0, %s91
      %s93 = sphi 0, %s91
      %s94 = sphi 0, %s93
      %s108 = sphi 0, %s94
      %s112 = sphi 0, %s112
      %s114 = sphi 0, %s112
      %s115 = sphi 0, %s114
      %s129 = sphi 0, %s115
      %s133 = sphi 0, %s133
      %s135 = sphi 0, %s133
      %s136 = sphi 0, %s135
      %s150 = sphi 0, %s136
      %s154 = sphi 0, %s154
      %s156 = sphi 0, %s154
      %s157 = sphi 0, %s156
      %s171 = sphi 0, %s157
      %s177 = sphi 0, %s179
      %s180 = sphi 0, %s177
      %s181 = sphi 0, %s180
      %s197 = sphi 0, %s181
    $region4: #{tpu_custom_call.1} parent=1 // loop_header_branch
      %18 = sbr.rel (%p16) target = $region8
    $region5: #{tpu_custom_call.1} parent=1 // loop_body
      %s20 = ssub.s32 %s15, 1
      %s21 = ssub.s32 %s15, 2
      %s22 = sadd.s32 %s15, 1
      %s23 = ssub.s32 %s15, %s22
      %p24 = scmp.eq.s32.totalorder %s23, 0
      %s26 = sadd.s32 %s25, 1
      %s27 = scalar_select %p24, %s25, %s26
      %p30 = pneg %p24
      %p31 = scmp.eq.s32.totalorder %s15, 1
      %p32 = por %p30, %p31
      %p33 = scmp.ne.s32.totalorder %s25, %s28
      %p34 = scmp.eq.s32.totalorder %s15, 0
      %p35 = por %p33, %p34
      %p36 = scmp.ne.s32.totalorder %s25, %s28
      %p37 = scmp.eq.s32.totalorder %s20, 1
      %p38 = por %p36, %p37
      %p39 = scmp.ne.s32.totalorder %s28, %s29
      %p40 = scmp.eq.s32.totalorder %s20, 0
      %p41 = por %p39, %p40
      %p42 = scmp.ne.s32.totalorder %s28, %s29
      %p43 = scmp.eq.s32.totalorder %s21, 1
      %p44 = por %p42, %p43
      %p46 = scmp.ne.s32.totalorder %s29, %s45
      %p47 = scmp.eq.s32.totalorder %s21, 0
      %p48 = por %p46, %p47
      %s50 = sadd.s32 %s49, 1
      %p53 = scmp.eq.s32.totalorder %s15, 1
      %p54 = scmp.ne.s32.totalorder %s49, %s51
      %p55 = scmp.eq.s32.totalorder %s15, 0
      %p56 = por %p54, %p55
      %p57 = scmp.ne.s32.totalorder %s49, %s51
      %p58 = scmp.eq.s32.totalorder %s20, 1
      %p59 = por %p57, %p58
      %p60 = scmp.ne.s32.totalorder %s51, %s52
      %p61 = scmp.eq.s32.totalorder %s20, 0
      %p62 = por %p60, %p61
      %p63 = scmp.ne.s32.totalorder %s51, %s52
      %p64 = scmp.eq.s32.totalorder %s21, 1
      %p65 = por %p63, %p64
      %p67 = scmp.ne.s32.totalorder %s52, %s66
      %p68 = scmp.eq.s32.totalorder %s21, 0
      %p69 = por %p67, %p68
      %s71 = sadd.s32 %s70, 1
      %p74 = scmp.eq.s32.totalorder %s15, 1
      %p75 = scmp.ne.s32.totalorder %s70, %s72
      %p76 = scmp.eq.s32.totalorder %s15, 0
      %p77 = por %p75, %p76
      %p78 = scmp.ne.s32.totalorder %s70, %s72
      %p79 = scmp.eq.s32.totalorder %s20, 1
      %p80 = por %p78, %p79
      %p81 = scmp.ne.s32.totalorder %s72, %s73
      %p82 = scmp.eq.s32.totalorder %s20, 0
      %p83 = por %p81, %p82
      %p84 = scmp.ne.s32.totalorder %s72, %s73
      %p85 = scmp.eq.s32.totalorder %s21, 1
      %p86 = por %p84, %p85
      %p88 = scmp.ne.s32.totalorder %s73, %s87
      %p89 = scmp.eq.s32.totalorder %s21, 0
      %p90 = por %p88, %p89
      %s92 = sadd.s32 %s91, 1
      %p95 = scmp.eq.s32.totalorder %s15, 1
      %p96 = scmp.ne.s32.totalorder %s91, %s93
      %p97 = scmp.eq.s32.totalorder %s15, 0
      %p98 = por %p96, %p97
      %p99 = scmp.ne.s32.totalorder %s91, %s93
      %p100 = scmp.eq.s32.totalorder %s20, 1
      %p101 = por %p99, %p100
      %p102 = scmp.ne.s32.totalorder %s93, %s94
      %p103 = scmp.eq.s32.totalorder %s20, 0
      %p104 = por %p102, %p103
      %p105 = scmp.ne.s32.totalorder %s93, %s94
      %p106 = scmp.eq.s32.totalorder %s21, 1
      %p107 = por %p105, %p106
      %p109 = scmp.ne.s32.totalorder %s94, %s108
      %p110 = scmp.eq.s32.totalorder %s21, 0
      %p111 = por %p109, %p110
      %s113 = sadd.s32 %s112, 1
      %p116 = scmp.eq.s32.totalorder %s15, 1
      %p117 = scmp.ne.s32.totalorder %s112, %s114
      %p118 = scmp.eq.s32.totalorder %s15, 0
      %p119 = por %p117, %p118
      %p120 = scmp.ne.s32.totalorder %s112, %s114
      %p121 = scmp.eq.s32.totalorder %s20, 1
      %p122 = por %p120, %p121
      %p123 = scmp.ne.s32.totalorder %s114, %s115
      %p124 = scmp.eq.s32.totalorder %s20, 0
      %p125 = por %p123, %p124
      %p126 = scmp.ne.s32.totalorder %s114, %s115
      %p127 = scmp.eq.s32.totalorder %s21, 1
      %p128 = por %p126, %p127
      %p130 = scmp.ne.s32.totalorder %s115, %s129
      %p131 = scmp.eq.s32.totalorder %s21, 0
      %p132 = por %p130, %p131
      %s134 = sadd.s32 %s133, 1
      %p137 = scmp.eq.s32.totalorder %s15, 1
      %p138 = scmp.ne.s32.totalorder %s133, %s135
      %p139 = scmp.eq.s32.totalorder %s15, 0
      %p140 = por %p138, %p139
      %p141 = scmp.ne.s32.totalorder %s133, %s135
      %p142 = scmp.eq.s32.totalorder %s20, 1
      %p143 = por %p141, %p142
      %p144 = scmp.ne.s32.totalorder %s135, %s136
      %p145 = scmp.eq.s32.totalorder %s20, 0
      %p146 = por %p144, %p145
      %p147 = scmp.ne.s32.totalorder %s135, %s136
      %p148 = scmp.eq.s32.totalorder %s21, 1
      %p149 = por %p147, %p148
      %p151 = scmp.ne.s32.totalorder %s136, %s150
      %p152 = scmp.eq.s32.totalorder %s21, 0
      %p153 = por %p151, %p152
      %s155 = sadd.s32 %s154, 1
      %p158 = scmp.eq.s32.totalorder %s15, 1
      %p159 = scmp.ne.s32.totalorder %s154, %s156
      %p160 = scmp.eq.s32.totalorder %s15, 0
      %p161 = por %p159, %p160
      %p162 = scmp.ne.s32.totalorder %s154, %s156
      %p163 = scmp.eq.s32.totalorder %s20, 1
      %p164 = por %p162, %p163
      %p165 = scmp.ne.s32.totalorder %s156, %s157
      %p166 = scmp.eq.s32.totalorder %s20, 0
      %p167 = por %p165, %p166
      %p168 = scmp.ne.s32.totalorder %s156, %s157
      %p169 = scmp.eq.s32.totalorder %s21, 1
      %p170 = por %p168, %p169
      %p172 = scmp.ne.s32.totalorder %s157, %s171
      %p173 = scmp.eq.s32.totalorder %s21, 0
      %p174 = por %p172, %p173
      %s175 = ssub.s32 %s15, %s22
      %p176 = scmp.eq.s32.totalorder %s175, 0
      %s178 = sadd.s32 %s177, 1
      %s179 = scalar_select %p176, %s177, %s178
      %p182 = pneg %p176
      %p183 = scmp.eq.s32.totalorder %s15, 1
      %p184 = por %p182, %p183
      %p185 = scmp.ne.s32.totalorder %s177, %s180
      %p186 = scmp.eq.s32.totalorder %s15, 0
      %p187 = por %p185, %p186
      %p188 = scmp.ne.s32.totalorder %s177, %s180
      %p189 = scmp.eq.s32.totalorder %s20, 1
      %p190 = por %p188, %p189
      %p191 = scmp.ne.s32.totalorder %s180, %s181
      %p192 = scmp.eq.s32.totalorder %s20, 0
      %p193 = por %p191, %p192
      %p194 = scmp.ne.s32.totalorder %s180, %s181
      %p195 = scmp.eq.s32.totalorder %s21, 1
      %p196 = por %p194, %p195
      %p198 = scmp.ne.s32.totalorder %s181, %s197
      %p199 = scmp.eq.s32.totalorder %s21, 0
      %p200 = por %p198, %p199
      %p201 = scmp.le.s32.totalorder 1, %s15
      %p202 = scmp.lt.s32.totalorder %s15, 3
      %p203 = pnand %p201, %p202
      %p204 = pneg %p203
      // Predicated region
      $region9: #{tpu_custom_call.1} parent=5 // pred_check
        _
      $region10: #{tpu_custom_call.1} parent=5 // pred_check_branch
        %206 = sbr.rel (%p203) target = $region12
      $region11: #{tpu_custom_call.1} parent=5 // pred_region
        %s207 = ssub.s32 %s15, 1
        // Predicated region
        $region13: #{tpu_custom_call.1} parent=11 // pred_check
          %p208 = pneg %p62
        $region14: #{tpu_custom_call.1} parent=11 // pred_check_branch
          %210 = sbr.rel (%p208) target = $region16
        $region15: #{tpu_custom_call.1} parent=11 // pred_region
          _
        $region16: #{tpu_custom_call.1} parent=11 // pred_fallthru
          _
        // Predicated region
        $region17: #{tpu_custom_call.1} parent=11 // pred_check
          %p211 = pneg %p83
        $region18: #{tpu_custom_call.1} parent=11 // pred_check_branch
          %213 = sbr.rel (%p211) target = $region20
        $region19: #{tpu_custom_call.1} parent=11 // pred_region
          _
        $region20: #{tpu_custom_call.1} parent=11 // pred_fallthru
          _
        // Predicated region
        $region21: #{tpu_custom_call.1} parent=11 // pred_check
          %p214 = pneg %p104
        $region22: #{tpu_custom_call.1} parent=11 // pred_check_branch
          %216 = sbr.rel (%p214) target = $region24
        $region23: #{tpu_custom_call.1} parent=11 // pred_region
          %s218 = ssub.s32 1024, 1024
          %219 = vsyncadd [#allocation3], %s218
          %s220 = sshll.u32 [#allocation2], 4
          %s221 = int_to_ptr.vmem [resolvable:$true] %s220
          %226 = dma.hbm_to_vmem [thread:$0]  %s3, 1024, %s221, [#allocation3], 64, 64, 4
        $region24: #{tpu_custom_call.1} parent=11 // pred_fallthru
          _
        // Predicated region
        $region25: #{tpu_custom_call.1} parent=11 // pred_check
          %p227 = pneg %p125
        $region26: #{tpu_custom_call.1} parent=11 // pred_check_branch
          %229 = sbr.rel (%p227) target = $region28
        $region27: #{tpu_custom_call.1} parent=11 // pred_region
          _
        $region28: #{tpu_custom_call.1} parent=11 // pred_fallthru
          _
        // Predicated region
        $region29: #{tpu_custom_call.1} parent=11 // pred_check
          %p230 = pneg %p146
        $region30: #{tpu_custom_call.1} parent=11 // pred_check_branch
          %232 = sbr.rel (%p230) target = $region32
        $region31: #{tpu_custom_call.1} parent=11 // pred_region
          %s234 = ssub.s32 1024, 1024
          %235 = vsyncadd [#allocation5], %s234
          %s236 = sshll.u32 [#allocation4], 4
          %s237 = int_to_ptr.vmem [resolvable:$true] %s236
          %242 = dma.hbm_to_vmem [thread:$0]  %s5, 1024, %s237, [#allocation5], 64, 64, 4
        $region32: #{tpu_custom_call.1} parent=11 // pred_fallthru
          _
        // Predicated region
        $region33: #{tpu_custom_call.1} parent=11 // pred_check
          %p243 = pneg %p167
        $region34: #{tpu_custom_call.1} parent=11 // pred_check_branch
          %245 = sbr.rel (%p243) target = $region36
        $region35: #{tpu_custom_call.1} parent=11 // pred_region
          _
        $region36: #{tpu_custom_call.1} parent=11 // pred_fallthru
          _
      $region12: #{tpu_custom_call.1} parent=5 // pred_fallthru
        _
      %p246 = scmp.lt.s32.totalorder %s15, 2
      // Predicated region
      $region37: #{tpu_custom_call.1} parent=5 // pred_check
        %p247 = pneg %p246
      $region38: #{tpu_custom_call.1} parent=5 // pred_check_branch
        %249 = sbr.rel (%p247) target = $region40
      $region39: #{tpu_custom_call.1} parent=5 // pred_region
        // Predicated region
        $region41: #{tpu_custom_call.1} parent=39 // pred_check
          %p250 = pneg %p35
        $region42: #{tpu_custom_call.1} parent=39 // pred_check_branch
          %252 = sbr.rel (%p250) target = $region44
        $region43: #{tpu_custom_call.1} parent=39 // pred_region
          %s253 = smul.u32 2, %s15
          %s254 = ssub.s32 3, %s253
          %p255 = scmp.lt.s32.totalorder %s254, 2
          %s256 = scalar_select %p255, %s254, 2
          %s257 = smul.u32 128, %s256
          %p258 = scmp.lt.s32.totalorder %s253, 2
          %s259 = scalar_select %p258, %s253, 2
          %s260 = smul.addr %s259, 8
          %s261 = scalar_lea.vmem %s0, %s260
          %s262 = smul.u32 2, %s15
          %s263 = ssub.s32 3, %s262
          %p264 = scmp.lt.s32.totalorder %s263, 2
          %s265 = scalar_select %p264, %s263, 2
          %s266 = smul.u32 128, %s265
        $region44: #{tpu_custom_call.1} parent=39 // pred_fallthru
          _
      $region40: #{tpu_custom_call.1} parent=5 // pred_fallthru
        _
      %p267 = scmp.le.s32.totalorder 1, %s15
      %p268 = scmp.lt.s32.totalorder %s15, 3
      %p269 = pnand %p267, %p268
      %p270 = pneg %p269
      // Predicated region
      $region45: #{tpu_custom_call.1} parent=5 // pred_check
        _
      $region46: #{tpu_custom_call.1} parent=5 // pred_check_branch
        %272 = sbr.rel (%p269) target = $region48
      $region47: #{tpu_custom_call.1} parent=5 // pred_region
        %s273 = ssub.s32 %s15, 1
        // Predicated region
        $region49: #{tpu_custom_call.1} parent=47 // pred_check
          %p274 = pneg %p104
        $region50: #{tpu_custom_call.1} parent=47 // pred_check_branch
          %276 = sbr.rel (%p274) target = $region52
        $region51: #{tpu_custom_call.1} parent=47 // pred_region
          %277 = dma.done [#allocation3], 1024
        $region52: #{tpu_custom_call.1} parent=47 // pred_fallthru
          _
        // Predicated region
        $region53: #{tpu_custom_call.1} parent=47 // pred_check
          %p278 = pneg %p146
        $region54: #{tpu_custom_call.1} parent=47 // pred_check_branch
          %280 = sbr.rel (%p278) target = $region56
        $region55: #{tpu_custom_call.1} parent=47 // pred_region
          %281 = dma.done [#allocation5], 1024
        $region56: #{tpu_custom_call.1} parent=47 // pred_fallthru
          _
        %s282 = smul.u32 2, %s20
        %s283 = ssub.s32 3, %s282
        %p284 = scmp.lt.s32.totalorder %s283, 2
        %s285 = scalar_select %p284, %s283, 2
        %s286 = smul.u32 128, %s285
        %p287 = scmp.lt.s32.totalorder %s282, 2
        %s288 = scalar_select %p287, %s282, 2
        %s289 = smul.addr %s288, 8
        %s290 = scalar_lea.vmem %s0, %s289
        %p291 = pneg %p41
        %p292 = pneg %p38
        %p293 = pneg %p62
        %p294 = pneg %p59
        %p295 = pneg %p83
        %p296 = pneg %p80
        %p297 = pneg %p104
        %p298 = pneg %p101
        %p299 = pneg %p125
        %p300 = pneg %p122
        %p301 = pneg %p146
        %p302 = pneg %p143
        %p303 = pneg %p167
        %p304 = pneg %p164
        %p305 = pneg %p193
        %p306 = pneg %p190
        %s307 = sand.u32 %s180, 1
        %s308 = sand.u32 %s180, 1
        %s309 = smul.addr %s308, 16
        %s310 = scalar_lea.vmem [#allocation6], %s309
        %s311 = smul.u32 2, %s20
        %s312 = ssub.s32 3, %s311
        %p313 = scmp.lt.s32.totalorder %s312, 2
        %s314 = scalar_select %p313, %s312, 2
        %s315 = smul.u32 128, %s314
        %p316 = scmp.lt.s32.totalorder %s311, 2
        %s317 = scalar_select %p316, %s311, 2
        %s318 = smul.addr %s317, 8
        %s319 = scalar_lea.vmem %s0, %s318
        %s320 = smul.u32 2, %s20
        %s321 = ssub.s32 3, %s320
        %p322 = scmp.lt.s32.totalorder %s321, 2
        %s323 = scalar_select %p322, %s321, 2
        %s324 = smul.u32 128, %s323
        %s325 = smul.u32 2, %s20
        %s326 = ssub.s32 3, %s325
        %p327 = scmp.lt.s32.totalorder %s326, 2
        %s328 = scalar_select %p327, %s326, 2
        %s329 = smul.u32 128, %s328
        %v331 = vld [vmem:[%s319] sm:$0xff]
        %v332 = vld [vmem:[%s319 + $0x8] sm:$0xff]
        %v333 = vpack.c.bf16 %v332, %v331
        %v334 = vld [vmem:[%s1] sm:$0xf]
        %v335 = vld [vmem:[%s1 + $0x4] sm:$0xf]
        %v336 = vld [vmem:[%s2] sm:$0x1]
        %v338 = vlaneseq
        %v339 = vshrl.u32 %v338, 7
        %v340 = vsub.s32 0, %v339
        %v341 = vrot.slane %v336, %v340
        %v345 = vunpack.c.l.b16 %v334
        %v346 = vunpack.c.l.b16 %v335
        %v347 = vpack.c.b16 %v346, %v345
        %vm349 = vcmask 130048
        %v351 = vsel %vm349, %v333, 0
        %353 = vmatprep.subr.bf16.mxu0 0
        %354 = vmatpush1.bf16.msra.mxu0 %v347
        %355 = vmatprep.subr.bf16.mxu0 0
        %356 = vmatpush1.bf16.msra.mxu0 0
        %357 = vmatprep.subr.bf16.mxu0 0
        %358 = vmatpush1.bf16.msra.mxu0 0
        %359 = vmatprep.subr.bf16.mxu0 0
        %360 = vmatpush1.bf16.msra.mxu0 0
        %361 = vmatprep.subr.bf16.mxu0 0
        %362 = vmatpush1.bf16.msra.mxu0 0
        %363 = vmatprep.subr.bf16.mxu0 0
        %364 = vmatpush1.bf16.msra.mxu0 0
        %365 = vmatprep.subr.bf16.mxu0 0
        %366 = vmatpush1.bf16.msra.mxu0 0
        %367 = vmatprep.subr.bf16.mxu0 0
        %368 = vmatpush1.bf16.msra.mxu0 0
        %369 = vmatprep.subr.bf16.mxu0 0
        %370 = vmatpush1.bf16.msra.mxu0 0
        %371 = vmatprep.subr.bf16.mxu0 0
        %372 = vmatpush1.bf16.msra.mxu0 0
        %373 = vmatprep.subr.bf16.mxu0 0
        %374 = vmatpush1.bf16.msra.mxu0 0
        %375 = vmatprep.subr.bf16.mxu0 0
        %376 = vmatpush1.bf16.msra.mxu0 0
        %377 = vmatprep.subr.bf16.mxu0 0
        %378 = vmatpush1.bf16.msra.mxu0 0
        %379 = vmatprep.subr.bf16.mxu0 0
        %380 = vmatpush1.bf16.msra.mxu0 0
        %381 = vmatprep.subr.bf16.mxu0 0
        %382 = vmatpush1.bf16.msra.mxu0 0
        %383 = vmatprep.subr.bf16.mxu0 0
        %384 = vmatpush1.bf16.msra.mxu0 0
        %385 = vmatprep.mubr.bf16.mxu0 0
        %386 = vmatmul.mubr.bf16.gmra.mrb[0].mxu0 %v351
        %v387 = vpop.f32.mrb[0].mxu0
        %v388 = vadd.f32 %v341, %v387
        %v389 = vpop.f32.mrb[0].mxu0
        %v390 = vpop.f32.mrb[0].mxu0
        %v391 = vadd.f32 %v341, %v390
        %v392 = vpop.f32.mrb[0].mxu0
        %393 = vdwg.mxu0
        %v394 = vmax.f32 %v388, 0.0
        %v395 = vmax.f32 %v391, 0.0
        %v396 = vpack.c.bf16 %v395, %v394
        %v397 = vld [vmem:[#allocation2] sm:$0xf]
        %v398 = vld [vmem:[#allocation2 + $0x4] sm:$0xf]
        %v399 = vld [vmem:[#allocation2 + $0x8] sm:$0xf]
        %v400 = vld [vmem:[#allocation2 + $0xc] sm:$0xf]
        %v401 = vld [vmem:[#allocation2 + $0x10] sm:$0xf]
        %v402 = vld [vmem:[#allocation2 + $0x14] sm:$0xf]
        %v403 = vld [vmem:[#allocation2 + $0x18] sm:$0xf]
        %v404 = vld [vmem:[#allocation2 + $0x1c] sm:$0xf]
        %v405 = vld [vmem:[#allocation2 + $0x20] sm:$0xf]
        %v406 = vld [vmem:[#allocation2 + $0x24] sm:$0xf]
        %v407 = vld [vmem:[#allocation2 + $0x28] sm:$0xf]
        %v408 = vld [vmem:[#allocation2 + $0x2c] sm:$0xf]
        %v409 = vld [vmem:[#allocation2 + $0x30] sm:$0xf]
        %v410 = vld [vmem:[#allocation2 + $0x34] sm:$0xf]
        %v411 = vld [vmem:[#allocation2 + $0x38] sm:$0xf]
        %v412 = vld [vmem:[#allocation2 + $0x3c] sm:$0xf]
        %v413 = vld [vmem:[%s4] sm:$0x1]
        %v415 = vlaneseq
        %v416 = vshrl.u32 %v415, 7
        %v417 = vsub.s32 0, %v416
        %v418 = vrot.slane %v413, %v417
        %v436 = vunpack.c.l.b16 %v397
        %v437 = vunpack.c.l.b16 %v398
        %v438 = vunpack.c.l.b16 %v399
        %v439 = vunpack.c.l.b16 %v400
        %v440 = vunpack.c.l.b16 %v401
        %v441 = vunpack.c.l.b16 %v402
        %v442 = vunpack.c.l.b16 %v403
        %v443 = vunpack.c.l.b16 %v404
        %v444 = vunpack.c.l.b16 %v405
        %v445 = vunpack.c.l.b16 %v406
        %v446 = vunpack.c.l.b16 %v407
        %v447 = vunpack.c.l.b16 %v408
        %v448 = vunpack.c.l.b16 %v409
        %v449 = vunpack.c.l.b16 %v410
        %v450 = vunpack.c.l.b16 %v411
        %v451 = vunpack.c.l.b16 %v412
        %v452 = vpack.c.b16 %v437, %v436
        %v453 = vpack.c.b16 %v439, %v438
        %v454 = vpack.c.b16 %v441, %v440
        %v455 = vpack.c.b16 %v443, %v442
        %v456 = vpack.c.b16 %v445, %v444
        %v457 = vpack.c.b16 %v447, %v446
        %v458 = vpack.c.b16 %v449, %v448
        %v459 = vpack.c.b16 %v451, %v450
        %468 = vmatprep.subr.bf16.mxu0 0
        %469 = vmatpush1.bf16.msra.mxu0 %v452
        %470 = vmatprep.subr.bf16.mxu0 0
        %471 = vmatpush1.bf16.msra.mxu0 %v453
        %472 = vmatprep.subr.bf16.mxu0 0
        %473 = vmatpush1.bf16.msra.mxu0 %v454
        %474 = vmatprep.subr.bf16.mxu0 0
        %475 = vmatpush1.bf16.msra.mxu0 %v455
        %476 = vmatprep.subr.bf16.mxu0 0
        %477 = vmatpush1.bf16.msra.mxu0 %v456
        %478 = vmatprep.subr.bf16.mxu0 0
        %479 = vmatpush1.bf16.msra.mxu0 %v457
        %480 = vmatprep.subr.bf16.mxu0 0
        %481 = vmatpush1.bf16.msra.mxu0 %v458
        %482 = vmatprep.subr.bf16.mxu0 0
        %483 = vmatpush1.bf16.msra.mxu0 %v459
        %484 = vmatprep.subr.bf16.mxu0 0
        %485 = vmatpush1.bf16.msra.mxu0 0
        %486 = vmatprep.subr.bf16.mxu0 0
        %487 = vmatpush1.bf16.msra.mxu0 0
        %488 = vmatprep.subr.bf16.mxu0 0
        %489 = vmatpush1.bf16.msra.mxu0 0
        %490 = vmatprep.subr.bf16.mxu0 0
        %491 = vmatpush1.bf16.msra.mxu0 0
        %492 = vmatprep.subr.bf16.mxu0 0
        %493 = vmatpush1.bf16.msra.mxu0 0
        %494 = vmatprep.subr.bf16.mxu0 0
        %495 = vmatpush1.bf16.msra.mxu0 0
        %496 = vmatprep.subr.bf16.mxu0 0
        %497 = vmatpush1.bf16.msra.mxu0 0
        %498 = vmatprep.subr.bf16.mxu0 0
        %499 = vmatpush1.bf16.msra.mxu0 0
        %500 = vmatprep.mubr.bf16.mxu0 0
        %501 = vmatmul.mubr.bf16.gmra.mrb[0].mxu0 %v396
        %v502 = vpop.f32.mrb[0].mxu0
        %v503 = vadd.f32 %v418, %v502
        %v504 = vpop.f32.mrb[0].mxu0
        %v505 = vpop.f32.mrb[0].mxu0
        %v506 = vadd.f32 %v418, %v505
        %v507 = vpop.f32.mrb[0].mxu0
        %508 = vdwg.mxu0
        %v509 = vmax.f32 %v503, 0.0
        %v510 = vmax.f32 %v506, 0.0
        %v511 = vpack.c.bf16 %v510, %v509
        %v512 = vld [vmem:[#allocation4] sm:$0xf]
        %v513 = vld [vmem:[#allocation4 + $0x4] sm:$0xf]
        %v514 = vld [vmem:[#allocation4 + $0x8] sm:$0xf]
        %v515 = vld [vmem:[#allocation4 + $0xc] sm:$0xf]
        %v516 = vld [vmem:[#allocation4 + $0x10] sm:$0xf]
        %v517 = vld [vmem:[#allocation4 + $0x14] sm:$0xf]
        %v518 = vld [vmem:[#allocation4 + $0x18] sm:$0xf]
        %v519 = vld [vmem:[#allocation4 + $0x1c] sm:$0xf]
        %v520 = vld [vmem:[#allocation4 + $0x20] sm:$0xf]
        %v521 = vld [vmem:[#allocation4 + $0x24] sm:$0xf]
        %v522 = vld [vmem:[#allocation4 + $0x28] sm:$0xf]
        %v523 = vld [vmem:[#allocation4 + $0x2c] sm:$0xf]
        %v524 = vld [vmem:[#allocation4 + $0x30] sm:$0xf]
        %v525 = vld [vmem:[#allocation4 + $0x34] sm:$0xf]
        %v526 = vld [vmem:[#allocation4 + $0x38] sm:$0xf]
        %v527 = vld [vmem:[#allocation4 + $0x3c] sm:$0xf]
        %v528 = vld [vmem:[%s6] sm:$0x1]
        %v530 = vlaneseq
        %v531 = vshrl.u32 %v530, 7
        %v532 = vsub.s32 0, %v531
        %v533 = vrot.slane %v528, %v532
        %v551 = vunpack.c.l.b16 %v512
        %v552 = vunpack.c.l.b16 %v513
        %v553 = vunpack.c.l.b16 %v514
        %v554 = vunpack.c.l.b16 %v515
        %v555 = vunpack.c.l.b16 %v516
        %v556 = vunpack.c.l.b16 %v517
        %v557 = vunpack.c.l.b16 %v518
        %v558 = vunpack.c.l.b16 %v519
        %v559 = vunpack.c.l.b16 %v520
        %v560 = vunpack.c.l.b16 %v521
        %v561 = vunpack.c.l.b16 %v522
        %v562 = vunpack.c.l.b16 %v523
        %v563 = vunpack.c.l.b16 %v524
        %v564 = vunpack.c.l.b16 %v525
        %v565 = vunpack.c.l.b16 %v526
        %v566 = vunpack.c.l.b16 %v527
        %v567 = vpack.c.b16 %v552, %v551
        %v568 = vpack.c.b16 %v554, %v553
        %v569 = vpack.c.b16 %v556, %v555
        %v570 = vpack.c.b16 %v558, %v557
        %v571 = vpack.c.b16 %v560, %v559
        %v572 = vpack.c.b16 %v562, %v561
        %v573 = vpack.c.b16 %v564, %v563
        %v574 = vpack.c.b16 %v566, %v565
        %583 = vmatprep.subr.bf16.mxu0 0
        %584 = vmatpush1.bf16.msra.mxu0 %v567
        %585 = vmatprep.subr.bf16.mxu0 0
        %586 = vmatpush1.bf16.msra.mxu0 %v568
        %587 = vmatprep.subr.bf16.mxu0 0
        %588 = vmatpush1.bf16.msra.mxu0 %v569
        %589 = vmatprep.subr.bf16.mxu0 0
        %590 = vmatpush1.bf16.msra.mxu0 %v570
        %591 = vmatprep.subr.bf16.mxu0 0
        %592 = vmatpush1.bf16.msra.mxu0 %v571
        %593 = vmatprep.subr.bf16.mxu0 0
        %594 = vmatpush1.bf16.msra.mxu0 %v572
        %595 = vmatprep.subr.bf16.mxu0 0
        %596 = vmatpush1.bf16.msra.mxu0 %v573
        %597 = vmatprep.subr.bf16.mxu0 0
        %598 = vmatpush1.bf16.msra.mxu0 %v574
        %599 = vmatprep.subr.bf16.mxu0 0
        %600 = vmatpush1.bf16.msra.mxu0 0
        %601 = vmatprep.subr.bf16.mxu0 0
        %602 = vmatpush1.bf16.msra.mxu0 0
        %603 = vmatprep.subr.bf16.mxu0 0
        %604 = vmatpush1.bf16.msra.mxu0 0
        %605 = vmatprep.subr.bf16.mxu0 0
        %606 = vmatpush1.bf16.msra.mxu0 0
        %607 = vmatprep.subr.bf16.mxu0 0
        %608 = vmatpush1.bf16.msra.mxu0 0
        %609 = vmatprep.subr.bf16.mxu0 0
        %610 = vmatpush1.bf16.msra.mxu0 0
        %611 = vmatprep.subr.bf16.mxu0 0
        %612 = vmatpush1.bf16.msra.mxu0 0
        %613 = vmatprep.subr.bf16.mxu0 0
        %614 = vmatpush1.bf16.msra.mxu0 0
        %615 = vmatprep.mubr.bf16.mxu0 0
        %616 = vmatmul.mubr.bf16.gmra.mrb[0].mxu0 %v511
        %v617 = vpop.f32.mrb[0].mxu0
        %v618 = vadd.f32 %v533, %v617
        %v619 = vpop.f32.mrb[0].mxu0
        %v620 = vpop.f32.mrb[0].mxu0
        %v621 = vadd.f32 %v533, %v620
        %v622 = vpop.f32.mrb[0].mxu0
        %623 = vdwg.mxu0
        %vm624 = vcmask 15360
        %625 = vst.msk [vmem:[%s310] sm:$0xff] %vm624, %v618
        %626 = vst.msk [vmem:[%s310 + $0x8] sm:$0xff] %vm624, %v621
        %s627 = sand.u32 %s180, 1
        %s628 = sand.u32 %s180, 1
        %s629 = smul.addr %s628, 16
        %s630 = scalar_lea.vmem [#allocation6], %s629
        // Predicated region
        $region57: #{tpu_custom_call.1} parent=47 // pred_check
          %p631 = pneg %p190
        $region58: #{tpu_custom_call.1} parent=47 // pred_check_branch
          %633 = sbr.rel (%p631) target = $region60
        $region59: #{tpu_custom_call.1} parent=47 // pred_region
          %s634 = smul.u32 2, %s20
          %s635 = ssub.s32 3, %s634
          %p636 = scmp.lt.s32.totalorder %s635, 2
          %s637 = scalar_select %p636, %s635, 2
          %s638 = smul.u32 128, %s637
          %p639 = scmp.ne.s32.totalorder 0, %s638
          %s640 = smul.addr %s634, 8
          %s641 = scalar_lea.vmem %s7, %s640
          // Predicated region
          $region61: #{tpu_custom_call.1} parent=59 // pred_check
            %p642 = pneg %p639
          $region62: #{tpu_custom_call.1} parent=59 // pred_check_branch
            %644 = sbr.rel (%p642) target = $region64
          $region63: #{tpu_custom_call.1} parent=59 // pred_region
            // Predicated region
            $region65: #{tpu_custom_call.1} parent=63 // pred_check
              _
            $region66: #{tpu_custom_call.1} parent=63 // pred_check_branch
              %646 = sbr.rel (0) target = $region68
            $region67: #{tpu_custom_call.1} parent=63 // pred_region
              // Predicated region
              $region87: #{tpu_custom_call.1} parent=67 // pred_check
                _
              $region88: #{tpu_custom_call.1} parent=67 // pred_check_branch
                %697 = sbr.rel (0) target = $region90
              $region89: #{tpu_custom_call.1} parent=67 // pred_region
                %s698 = sshrl.u32 %s637, 1
                // While loop
                $region91: #{tpu_custom_call.1} parent=89 // loop_pre_header
                  _
                $region92: #{tpu_custom_call.1} parent=89 // loop_header
                  %s700 = sphi 0, %s702
                  %p701 = scmp.ge.s32.totalorder %s700, %s698
                  %s705 = sphi 0, %s714
                  %s706 = sphi %s630, %s717
                  %s707 = sphi %s641, %s718
                $region93: #{tpu_custom_call.1} parent=89 // loop_header_branch
                  %704 = sbr.rel (%p701) target = $region97
                $region94: #{tpu_custom_call.1} parent=89 // loop_body
                  %v708 = vld [vmem:[%s706] sm:$0xff]
                  %709 = vst [vmem:[%s707] sm:$0xff] %v708
                  %v710 = vld [vmem:[%s706 + $0x8] sm:$0xff]
                  %711 = vst [vmem:[%s707 + $0x8] sm:$0xff] %v710
                  %s712 = sadd.s32 1, %s705
                  %p713 = scmp.ge.s32.totalorder %s712, %s698
                  %s714 = scalar_select %p713, 0, %s712
                  %s715 = smul.u32 %s714, 16
                  %s716 = smul.u32 %s714, 16
                  %s717 = scalar_lea.vmem %s630, %s715 [#allocation6]
                  %s718 = scalar_lea.vmem %s641, %s716
                $region95: #{tpu_custom_call.1} parent=89 // loop_footer
                  %s702 = sadd.s32 %s700, 1
                $region96: #{tpu_custom_call.1} parent=89 // loop_footer_branch
                  %699 = sbr.rel target = $region92
                $region97: #{tpu_custom_call.1} parent=89 // loop_exit
                  _
                %s719 = sshrl.u32 %s637, 1
                %s720 = sand.u32 %s637, 1
                %s721 = smul.u32 %s719, 2
                %s722 = smul.u32 8, %s721
                %s723 = scalar_lea.vmem %s630, %s722 [#allocation6]
                %s724 = smul.u32 8, %s721
                %s725 = scalar_lea.vmem %s641, %s724
                // While loop
                $region98: #{tpu_custom_call.1} parent=89 // loop_pre_header
                  _
                $region99: #{tpu_custom_call.1} parent=89 // loop_header
                  %s727 = sphi 0, %s729
                  %p728 = scmp.ge.s32.totalorder %s727, %s720
                  %s732 = sphi 0, %s739
                  %s733 = sphi %s723, %s742
                  %s734 = sphi %s725, %s743
                $region100: #{tpu_custom_call.1} parent=89 // loop_header_branch
                  %731 = sbr.rel (%p728) target = $region104
                $region101: #{tpu_custom_call.1} parent=89 // loop_body
                  %v735 = vld [vmem:[%s733] sm:$0xff]
                  %736 = vst [vmem:[%s734] sm:$0xff] %v735
                  %s737 = sadd.s32 1, %s732
                  %p738 = scmp.ge.s32.totalorder %s737, %s720
                  %s739 = scalar_select %p738, 0, %s737
                  %s740 = smul.u32 %s739, 8
                  %s741 = smul.u32 %s739, 8
                  %s742 = scalar_lea.vmem %s723, %s740 [#allocation6]
                  %s743 = scalar_lea.vmem %s725, %s741
                $region102: #{tpu_custom_call.1} parent=89 // loop_footer
                  %s729 = sadd.s32 %s727, 1
                $region103: #{tpu_custom_call.1} parent=89 // loop_footer_branch
                  %726 = sbr.rel target = $region99
                $region104: #{tpu_custom_call.1} parent=89 // loop_exit
                  _
              $region90: #{tpu_custom_call.1} parent=67 // pred_fallthru
                _
              // Predicated region
              $region105: #{tpu_custom_call.1} parent=67 // pred_check
                _
              $region106: #{tpu_custom_call.1} parent=67 // pred_check_branch
                %745 = sbr.rel target = $region108
              $region107: #{tpu_custom_call.1} parent=67 // pred_region
                _
              $region108: #{tpu_custom_call.1} parent=67 // pred_fallthru
                _
            $region68: #{tpu_custom_call.1} parent=63 // pred_fallthru
              _
            // Predicated region
            $region69: #{tpu_custom_call.1} parent=63 // pred_check
              _
            $region70: #{tpu_custom_call.1} parent=63 // pred_check_branch
              %648 = sbr.rel target = $region72
            $region71: #{tpu_custom_call.1} parent=63 // pred_region
              %s650 = sshrl.u32 %s637, 1
              // While loop
              $region73: #{tpu_custom_call.1} parent=71 // loop_pre_header
                _
              $region74: #{tpu_custom_call.1} parent=71 // loop_header
                %s652 = sphi 0, %s654
                %p653 = scmp.ge.s32.totalorder %s652, %s650
                %s657 = sphi 0, %s666
                %s658 = sphi %s630, %s669
                %s659 = sphi %s641, %s670
              $region75: #{tpu_custom_call.1} parent=71 // loop_header_branch
                %656 = sbr.rel (%p653) target = $region79
              $region76: #{tpu_custom_call.1} parent=71 // loop_body
                %v660 = vld [vmem:[%s658] sm:$0xff]
                %661 = vst [vmem:[%s659] sm:$0xff] %v660
                %v662 = vld [vmem:[%s658 + $0x8] sm:$0xff]
                %663 = vst [vmem:[%s659 + $0x8] sm:$0xff] %v662
                %s664 = sadd.s32 1, %s657
                %p665 = scmp.ge.s32.totalorder %s664, %s650
                %s666 = scalar_select %p665, 0, %s664
                %s667 = smul.u32 %s666, 16
                %s668 = smul.u32 %s666, 16
                %s669 = scalar_lea.vmem %s630, %s667 [#allocation6]
                %s670 = scalar_lea.vmem %s641, %s668
              $region77: #{tpu_custom_call.1} parent=71 // loop_footer
                %s654 = sadd.s32 %s652, 1
              $region78: #{tpu_custom_call.1} parent=71 // loop_footer_branch
                %651 = sbr.rel target = $region74
              $region79: #{tpu_custom_call.1} parent=71 // loop_exit
                _
              %s671 = sshrl.u32 %s637, 1
              %s672 = sand.u32 %s637, 1
              %s673 = smul.u32 %s671, 2
              %s674 = smul.u32 8, %s673
              %s675 = scalar_lea.vmem %s630, %s674 [#allocation6]
              %s676 = smul.u32 8, %s673
              %s677 = scalar_lea.vmem %s641, %s676
              // While loop
              $region80: #{tpu_custom_call.1} parent=71 // loop_pre_header
                _
              $region81: #{tpu_custom_call.1} parent=71 // loop_header
                %s679 = sphi 0, %s681
                %p680 = scmp.ge.s32.totalorder %s679, %s672
                %s684 = sphi 0, %s691
                %s685 = sphi %s675, %s694
                %s686 = sphi %s677, %s695
              $region82: #{tpu_custom_call.1} parent=71 // loop_header_branch
                %683 = sbr.rel (%p680) target = $region86
              $region83: #{tpu_custom_call.1} parent=71 // loop_body
                %v687 = vld [vmem:[%s685] sm:$0xff]
                %688 = vst [vmem:[%s686] sm:$0xff] %v687
                %s689 = sadd.s32 1, %s684
                %p690 = scmp.ge.s32.totalorder %s689, %s672
                %s691 = scalar_select %p690, 0, %s689
                %s692 = smul.u32 %s691, 8
                %s693 = smul.u32 %s691, 8
                %s694 = scalar_lea.vmem %s675, %s692 [#allocation6]
                %s695 = scalar_lea.vmem %s677, %s693
              $region84: #{tpu_custom_call.1} parent=71 // loop_footer
                %s681 = sadd.s32 %s679, 1
              $region85: #{tpu_custom_call.1} parent=71 // loop_footer_branch
                %678 = sbr.rel target = $region81
              $region86: #{tpu_custom_call.1} parent=71 // loop_exit
                _
            $region72: #{tpu_custom_call.1} parent=63 // pred_fallthru
              _
          $region64: #{tpu_custom_call.1} parent=59 // pred_fallthru
            _
          %746 = vnop
        $region60: #{tpu_custom_call.1} parent=47 // pred_fallthru
          _
      $region48: #{tpu_custom_call.1} parent=5 // pred_fallthru
        _
      %p747 = scmp.le.s32.totalorder 2, %s15
      // Predicated region
      $region109: #{tpu_custom_call.1} parent=5 // pred_check
        %p748 = pneg %p747
      $region110: #{tpu_custom_call.1} parent=5 // pred_check_branch
        %750 = sbr.rel (%p748) target = $region112
      $region111: #{tpu_custom_call.1} parent=5 // pred_region
        %s751 = ssub.s32 %s15, 2
        // Predicated region
        $region113: #{tpu_custom_call.1} parent=111 // pred_check
          %p752 = pneg %p196
        $region114: #{tpu_custom_call.1} parent=111 // pred_check_branch
          %754 = sbr.rel (%p752) target = $region116
        $region115: #{tpu_custom_call.1} parent=111 // pred_region
          %s755 = sand.u32 %s181, 1
          %s756 = sand.u32 %s181, 1
          %s757 = smul.addr %s756, 16
          %s758 = scalar_lea.vmem [#allocation6], %s757
        $region116: #{tpu_custom_call.1} parent=111 // pred_fallthru
          _
      $region112: #{tpu_custom_call.1} parent=5 // pred_fallthru
        _
    $region6: #{tpu_custom_call.1} parent=1 // loop_footer
      %s19 = sadd.s32 1, %s15
    $region7: #{tpu_custom_call.1} parent=1 // loop_footer_branch
      %14 = sbr.rel target = $region3
    $region8: #{tpu_custom_call.1} parent=1 // loop_exit
      _
    %759 = vsyncpa [#allocation3], 1
    %s760 = scalar_lea.sflag [#allocation3], 1
    %761 = vsyncpa %s760, 1
    %762 = vsyncpa [#allocation5], 1

</llo_original>
